<compile_context>
chip_gen: v7x
topology: tpu7x:2x2x1
jax: 0.10.0
libtpu: 0.0.40
codegen_flags: <defaults>
</compile_context>

<pallas_src>
import jax
import jax.numpy as jnp
from jax import lax
from jax.experimental import pallas as pl
from jax.experimental.pallas import tpu as pltpu


_MAX_ROW_BLOCK = 512  # rows (sublanes) per grid step


def _row_block(n_rows):
    # Use the full extent when it fits in one block (also covers row counts
    # that are not a multiple of 8); otherwise a large 8-aligned tile.
    return n_rows if n_rows <= _MAX_ROW_BLOCK else _MAX_ROW_BLOCK


def _pe_gather_kernel(idx_ref, x_ref, pe_ref, o_ref):
    # idx_ref: (TP, 1) int32  per-row gather indices (VMEM)
    # x_ref  : (TP, D)        input rows
    # pe_ref : (L, D) f32     full positional-encoding table (resident block)
    # o_ref  : (TP, D)        output rows
    tp = x_ref.shape[0]
    table_len = pe_ref.shape[0]
    # Vectorized gather as a one-hot matmul on the MXU.  Out-of-range indices
    # produce an all-zero one-hot row (documented: no bounds error like torch).
    one_hot = (idx_ref[...] ==
               lax.broadcasted_iota(jnp.int32, (tp, table_len), 1)
               ).astype(jnp.float32)
    rows = jnp.dot(one_hot, pe_ref[...], preferred_element_type=jnp.float32)
    o_ref[...] = (x_ref[...].astype(jnp.float32) + rows).astype(o_ref.dtype)


def _pe_add_kernel(x_ref, pe_ref, o_ref):
    # indices=None fast path: pe rows are a contiguous slice aligned with x.
    # x_ref/o_ref: (1, TP, D); pe_ref: (TP, D) f32.
    o_ref[0] = (x_ref[0].astype(jnp.float32) + pe_ref[...]).astype(o_ref.dtype)


@jax.jit
def _pe_gather_call(x2d, idx2d, pe_table):
    bp, d = x2d.shape
    table_len = pe_table.shape[0]
    tp = _row_block(bp)
    grid = (pl.cdiv(bp, tp),)
    itemsize = x2d.dtype.itemsize

    cost = pl.CostEstimate(
        flops=2 * bp * table_len * d + bp * d,
        transcendentals=0,
        bytes_accessed=2 * bp * d * itemsize + table_len * d * 4 + bp * 4,
    )
    # VMEM budget: double-buffered x/out/idx blocks + resident (double-
    # buffered) pe table + the in-register one-hot block, with headroom.
    need = (2 * (2 * tp * d * itemsize + tp * 4)
            + 2 * table_len * d * 4
            + tp * table_len * 4)
    vmem_limit = int(min(64 * 2**20, max(32 * 2**20, int(1.5 * need))))

    return pl.pallas_call(
        _pe_gather_kernel,
        grid=grid,
        in_specs=[
            pl.BlockSpec((tp, 1), lambda i: (i, 0)),          # indices
            pl.BlockSpec((tp, d), lambda i: (i, 0)),          # x rows
            pl.BlockSpec((table_len, d), lambda i: (0, 0)),   # pe (resident)
        ],
        out_specs=pl.BlockSpec((tp, d), lambda i: (i, 0)),
        out_shape=jax.ShapeDtypeStruct((bp, d), x2d.dtype),
        compiler_params=pltpu.CompilerParams(
            dimension_semantics=("parallel",),
            vmem_limit_bytes=vmem_limit),
        cost_estimate=cost,
    )(idx2d, x2d, pe_table)


@jax.jit
def _pe_add_call(x, pe_rows):
    b, p, d = x.shape
    tp = _row_block(p)
    grid = (b, pl.cdiv(p, tp))
    itemsize = x.dtype.itemsize

    cost = pl.CostEstimate(
        flops=b * p * d,
        transcendentals=0,
        bytes_accessed=2 * b * p * d * itemsize + p * d * 4,
    )

    return pl.pallas_call(
        _pe_add_kernel,
        grid=grid,
        in_specs=[
            pl.BlockSpec((1, tp, d), lambda bi, j: (bi, j, 0)),   # x
            pl.BlockSpec((tp, d), lambda bi, j: (j, 0)),          # pe rows
        ],
        out_specs=pl.BlockSpec((1, tp, d), lambda bi, j: (bi, j, 0)),
        out_shape=jax.ShapeDtypeStruct((b, p, d), x.dtype),
        compiler_params=pltpu.CompilerParams(
            dimension_semantics=("parallel", "parallel")),
        cost_estimate=cost,
    )(x, pe_rows)


def pe_forward(x, pe_param, indices=None):
    """PE.forward: x (B, P, D), pe_param (1, max_len, D), indices (B, P)|None."""
    B, P, D = x.shape
    assert pe_param.ndim == 3 and pe_param.shape[0] == 1, \
        "pe parameter must have shape (1, max_len, dim)"
    assert pe_param.shape[-1] == D, "last dim of x must equal the PE dim"
    pe_table = pe_param[0].astype(jnp.float32)          # (max_len, D)
    max_len = pe_table.shape[0]

    if indices is None:
        assert P <= max_len, "sequence length exceeds max_len"
        return _pe_add_call(x, pe_table[:P])             # gather-free fast path

    assert indices.shape == (B, P)
    idx2d = indices.reshape(B * P, 1).astype(jnp.int32)
    x2d = x.reshape(B * P, D)
    out2d = _pe_gather_call(x2d, idx2d, pe_table)
    return out2d.reshape(B, P, D)


def _reference(x, pe_param, indices=None):
    B, P, D = x.shape
    if indices is None:
        indices = jnp.broadcast_to(jnp.arange(P, dtype=jnp.int32)[None, :], (B, P))
    return x + pe_param[0][indices]


if __name__ == "__main__":
    key = jax.random.PRNGKey(0)
    k1, k2, k3, k4, k5, k6 = jax.random.split(key, 6)

    # Case 1: small shapes, explicit gather indices + default (None) path.
    B, P, D, max_len = 2, 16, 128, 64
    x = jax.random.normal(k1, (B, P, D), jnp.float32)
    # TODO(synk): trunc_normal_ is host-side parameter init, not forward-pass
    # compute; a truncated-normal draw stands in for the learned parameter.
    pe_param = 0.02 * jax.random.truncated_normal(
        k2, -2.0, 2.0, (1, max_len, D), jnp.float32)
    indices = jax.random.randint(k3, (B, P), 0, max_len, jnp.int32)

    y = pe_forward(x, pe_param, indices)
    y_none = pe_forward(x, pe_param, None)

    # Case 2: module-default max_len=1000, non-power-of-2 rows, wider dim.
    B2, P2, D2, L2 = 3, 40, 256, 1000
    x2 = jax.random.normal(k4, (B2, P2, D2), jnp.float32)
    pe2 = 0.02 * jax.random.truncated_normal(
        k5, -2.0, 2.0, (1, L2, D2), jnp.float32)
    idx2 = jax.random.randint(k6, (B2, P2), 0, L2, jnp.int32)
    y2 = pe_forward(x2, pe2, idx2)

    y, y_none, y2 = jax.block_until_ready((y, y_none, y2))

    # The one-hot MXU gather is exact up to the f32 matmul pass decomposition;
    # with |pe| <= 0.04 any rounding is << 1e-4.  The None path is exact.
    assert y.shape == (B, P, D) and y.dtype == jnp.float32
    assert jnp.allclose(y, _reference(x, pe_param, indices), atol=1e-4, rtol=0)
    assert jnp.allclose(y_none, _reference(x, pe_param, None), atol=1e-6, rtol=0)
    assert jnp.allclose(y2, _reference(x2, pe2, idx2), atol=1e-4, rtol=0)

    print("KERNEL_OK")
</pallas_src>

<mosaic_0001>
module attributes {stable_mosaic.version = 11 : i64} {
  func.func @_pe_gather_kernel(%arg0: i32, %arg1: memref<32x1xi32, #tpu.memory_space<vmem>>, %arg2: memref<32x128xf32, #tpu.memory_space<vmem>>, %arg3: memref<64x128xf32, #tpu.memory_space<vmem>>, %arg4: memref<32x128xf32, #tpu.memory_space<vmem>>) attributes {dimension_semantics = [#tpu.dimension_semantics<parallel>], iteration_bounds = array<i64: 1>, scalar_prefetch = 0 : i64, scratch_operands = 0 : i64, tpu.core_type = #tpu.core_type<tc>, window_params = [{transform_indices = @transform_0, window_bounds = array<i64: 32, 1>}, {transform_indices = @transform_1, window_bounds = array<i64: 32, 128>}, {pipeline_mode = #tpu.pipeline_mode<synchronous>, transform_indices = @transform_2, window_bounds = array<i64: 64, 128>}, {transform_indices = @transform_3, window_bounds = array<i64: 32, 128>}]} {
    %c0 = arith.constant 0 : index
    %c0_0 = arith.constant 0 : index
    %0 = vector.load %arg1[%c0, %c0_0] : memref<32x1xi32, #tpu.memory_space<vmem>>, vector<32x1xi32>
    %1 = tpu.iota {dimensions = array<i32: 1>} : vector<32x64xi32>
    %2 = vector.broadcast %0 : vector<32x1xi32> to vector<32x64xi32>
    %3 = arith.cmpi eq, %2, %1 : vector<32x64xi32>
    %4 = arith.extui %3 : vector<32x64xi1> to vector<32x64xi32>
    %5 = arith.sitofp %4 : vector<32x64xi32> to vector<32x64xf32>
    %c0_1 = arith.constant 0 : index
    %c0_2 = arith.constant 0 : index
    %6 = vector.load %arg3[%c0_1, %c0_2] : memref<64x128xf32, #tpu.memory_space<vmem>>, vector<64x128xf32>
    %cst = arith.constant dense<0.000000e+00> : vector<32x128xf32>
    %7 = tpu.matmul %5, %6, %cst {dimension_numbers = #tpu.dot_dimension_numbers<[1], [0], [0], [1], [0, 0, 1, 1], [], []>} : vector<32x64xf32>, vector<64x128xf32>, vector<32x128xf32> -> vector<32x128xf32>
    %c0_3 = arith.constant 0 : index
    %c0_4 = arith.constant 0 : index
    %8 = vector.load %arg2[%c0_3, %c0_4] : memref<32x128xf32, #tpu.memory_space<vmem>>, vector<32x128xf32>
    %9 = arith.addf %8, %7 : vector<32x128xf32>
    %c0_5 = arith.constant 0 : index
    %c0_6 = arith.constant 0 : index
    %10 = vector.load %arg4[%c0_5, %c0_6] : memref<32x128xf32, #tpu.memory_space<vmem>>, vector<32x128xf32>
    tpu.vector_store %arg4[%c0_5, %c0_6], %9 {strides = array<i32>} : memref<32x128xf32, #tpu.memory_space<vmem>>, vector<32x128xf32>,
    return
  }
  func.func @transform_0(%arg0: i32) -> (i32, i32) {
    %c0_i32 = arith.constant 0 : i32
    %c0_i32_0 = arith.constant 0 : i32
    return %arg0, %c0_i32 : i32, i32
  }
  func.func @transform_1(%arg0: i32) -> (i32, i32) {
    %c0_i32 = arith.constant 0 : i32
    %c0_i32_0 = arith.constant 0 : i32
    return %arg0, %c0_i32 : i32, i32
  }
  func.func @transform_2(%arg0: i32) -> (i32, i32) {
    %c0_i32 = arith.constant 0 : i32
    %c0_i32_0 = arith.constant 0 : i32
    %c0_i32_1 = arith.constant 0 : i32
    return %c0_i32, %c0_i32_0 : i32, i32
  }
  func.func @transform_3(%arg0: i32) -> (i32, i32) {
    %c0_i32 = arith.constant 0 : i32
    %c0_i32_0 = arith.constant 0 : i32
    return %arg0, %c0_i32 : i32, i32
  }
}

</mosaic_0001>

<llo_original>
// kernel: _pe_gather_call.1
$region0: #{_pe_gather_call.1}
  #allocation0 [shape = 'u32[]', space=smem, size = 0x4, offset = 0x4, fixed_abs, tag = 'smem constant byte address 0x4 - core index']
  #allocation1 [shape = 'u32[144,128]{1,0:T(1,128)}', space=vmem, size = 0x12000, scoped, tag = 'internal scratch']
  %s0 = inlined_call_operand.vmem [shape: s32[32,1], index: 0, kind: input, shape index: {}]
  %s1 = inlined_call_operand.vmem [shape: f32[32,128], index: 1, kind: input, shape index: {}]
  %s2 = inlined_call_operand.hbm [shape: f32[64,128], index: 2, kind: input, shape index: {}]
  %s3 = inlined_call_operand.hbm [shape: f32[32,128], index: 3, kind: output, shape index: {}]
  %s4 = sld [smem:[#allocation0]]
  $region26: #{_pe_gather_call.1} parent=0
    _
  %s6 = ssub.s32 1, %s4
  %s7 = scalar_select 0, %s6, %s4
  $region1: #{_pe_gather_call.1} parent=0
    #allocation2 [shape = 'u8[32768]{0}', space=vmem, size = 0x8000, scoped, tag = 'input window, operand 2, single buffered']
    #allocation3 [shape = 's32[1]{0}', space=sflag, size = 0x4, scoped, tag = 'scoped memory for _pe_gather_call.1']
    #allocation4 [shape = 's32[1]{0}', space=sflag, size = 0x4, scoped, tag = 'scoped memory for _pe_gather_call.1']
    #allocation5 [shape = 'u8[16384]{0}', space=vmem, size = 0x4000, scoped, tag = 'output window, operand 0, single buffered']
    %8 = vsyncpa [#allocation3], 0
    %9 = vsyncpa [#allocation4], 0
    // Predicated region
    $region2: #{_pe_gather_call.1} parent=1 // pred_check
      _
    $region3: #{_pe_gather_call.1} parent=1 // pred_check_branch
      %11 = sbr.rel (0) target = $region5
    $region4: #{_pe_gather_call.1} parent=1 // pred_region
      _
    $region5: #{_pe_gather_call.1} parent=1 // pred_fallthru
      _
    // Predicated region
    $region6: #{_pe_gather_call.1} parent=1 // pred_check
      _
    $region7: #{_pe_gather_call.1} parent=1 // pred_check_branch
      %13 = sbr.rel (0) target = $region9
    $region8: #{_pe_gather_call.1} parent=1 // pred_region
      _
    $region9: #{_pe_gather_call.1} parent=1 // pred_fallthru
      _
    // Predicated region
    $region10: #{_pe_gather_call.1} parent=1 // pred_check
      _
    $region11: #{_pe_gather_call.1} parent=1 // pred_check_branch
      %15 = sbr.rel (0) target = $region13
    $region12: #{_pe_gather_call.1} parent=1 // pred_region
      %s17 = ssub.s32 1024, 1024
      %18 = vsyncadd [#allocation3], %s17
      %s19 = sshll.u32 [#allocation2], 4
      %s20 = int_to_ptr.vmem [resolvable:$true] %s19
      %25 = dma.hbm_to_vmem [thread:$0]  %s2, 1024, %s20, [#allocation3], 128, 128, 8
    $region13: #{_pe_gather_call.1} parent=1 // pred_fallthru
      _
    // Predicated region
    $region14: #{_pe_gather_call.1} parent=1 // pred_check
      _
    $region15: #{_pe_gather_call.1} parent=1 // pred_check_branch
      %27 = sbr.rel (0) target = $region17
    $region16: #{_pe_gather_call.1} parent=1 // pred_region
      %28 = dma.done [#allocation3], 1024
    $region17: #{_pe_gather_call.1} parent=1 // pred_fallthru
      _
    %v29 = vld [vmem:[%s0] sm:$0xff]
    %v30 = vld [vmem:[%s0 + $0x8] sm:$0xff]
    %v31 = vld [vmem:[%s0 + $0x10] sm:$0xff]
    %v32 = vld [vmem:[%s0 + $0x18] sm:$0xff]
    %v33 = vlaneseq
    %v34 = vand.u32 %v33, 127
    %35 = vset.pattern.permute.xlu0 0
    %36 = vperm.xlu0 %35, %v29
    %v37 = vpop.permute.xlu0 %36
    %38 = vset.pattern.permute.xlu0 0
    %39 = vperm.xlu0 %38, %v30
    %v40 = vpop.permute.xlu0 %39
    %41 = vset.pattern.permute.xlu0 0
    %42 = vperm.xlu0 %41, %v31
    %v43 = vpop.permute.xlu0 %42
    %44 = vset.pattern.permute.xlu0 0
    %45 = vperm.xlu0 %44, %v32
    %v46 = vpop.permute.xlu0 %45
    %vm47 = vcmp.eq.s32.totalorder %v37, %v34
    %vm48 = vcmp.eq.s32.totalorder %v40, %v34
    %vm49 = vcmp.eq.s32.totalorder %v43, %v34
    %vm50 = vcmp.eq.s32.totalorder %v46, %v34
    %v51 = vsel %vm47, 1, 0
    %v52 = vsel %vm48, 1, 0
    %v53 = vsel %vm49, 1, 0
    %v54 = vsel %vm50, 1, 0
    %v55 = vcvt.s32.f32 %v51
    %v56 = vcvt.s32.f32 %v52
    %v57 = vcvt.s32.f32 %v53
    %v58 = vcvt.s32.f32 %v54
    %v59 = vld [vmem:[#allocation2] sm:$0xff]
    %v60 = vld [vmem:[#allocation2 + $0x8] sm:$0xff]
    %v61 = vld [vmem:[#allocation2 + $0x10] sm:$0xff]
    %v62 = vld [vmem:[#allocation2 + $0x18] sm:$0xff]
    %v63 = vld [vmem:[#allocation2 + $0x20] sm:$0xff]
    %v64 = vld [vmem:[#allocation2 + $0x28] sm:$0xff]
    %v65 = vld [vmem:[#allocation2 + $0x30] sm:$0xff]
    %v66 = vld [vmem:[#allocation2 + $0x38] sm:$0xff]
    %vm67 = vcmask 523264
    %v69 = vsel %vm67, %v55, 0
    %v72 = vsel %vm67, %v56, 0
    %v75 = vsel %vm67, %v57, 0
    %v78 = vsel %vm67, %v58, 0
    %80 = vmatprep.subr.mxu0 0.0
    %81 = vmatpush1.msra.mxu0 %v59
    %82 = vmatprep.subr.mxu0 0.0
    %83 = vmatpush1.msra.mxu0 %v60
    %84 = vmatprep.subr.mxu0 0.0
    %85 = vmatpush1.msra.mxu0 %v61
    %86 = vmatprep.subr.mxu0 0.0
    %87 = vmatpush1.msra.mxu0 %v62
    %88 = vmatprep.subr.mxu0 0.0
    %89 = vmatpush1.msra.mxu0 %v63
    %90 = vmatprep.subr.mxu0 0.0
    %91 = vmatpush1.msra.mxu0 %v64
    %92 = vmatprep.subr.mxu0 0.0
    %93 = vmatpush1.msra.mxu0 %v65
    %94 = vmatprep.subr.mxu0 0.0
    %95 = vmatpush1.msra.mxu0 %v66
    %96 = vmatprep.subr.mxu0 0.0
    %97 = vmatpush1.msra.mxu0 0.0
    %98 = vmatprep.subr.mxu0 0.0
    %99 = vmatpush1.msra.mxu0 0.0
    %100 = vmatprep.subr.mxu0 0.0
    %101 = vmatpush1.msra.mxu0 0.0
    %102 = vmatprep.subr.mxu0 0.0
    %103 = vmatpush1.msra.mxu0 0.0
    %104 = vmatprep.subr.mxu0 0.0
    %105 = vmatpush1.msra.mxu0 0.0
    %106 = vmatprep.subr.mxu0 0.0
    %107 = vmatpush1.msra.mxu0 0.0
    %108 = vmatprep.subr.mxu0 0.0
    %109 = vmatpush1.msra.mxu0 0.0
    %110 = vmatprep.subr.mxu0 0.0
    %111 = vmatpush1.msra.mxu0 0.0
    %112 = vmatprep.subr.mxu0 0.0
    %113 = vmatpush1.msra.mxu0 0.0
    %114 = vmatprep.subr.mxu0 0.0
    %115 = vmatpush1.msra.mxu0 0.0
    %116 = vmatprep.subr.mxu0 0.0
    %117 = vmatpush1.msra.mxu0 0.0
    %118 = vmatprep.subr.mxu0 0.0
    %119 = vmatpush1.msra.mxu0 0.0
    %120 = vmatprep.subr.mxu0 0.0
    %121 = vmatpush1.msra.mxu0 0.0
    %122 = vmatprep.subr.mxu0 0.0
    %123 = vmatpush1.msra.mxu0 0.0
    %124 = vmatprep.subr.mxu0 0.0
    %125 = vmatpush1.msra.mxu0 0.0
    %126 = vmatprep.subr.mxu0 0.0
    %127 = vmatpush1.msra.mxu0 0.0
    %128 = vmatprep.subr.mxu0 0.0
    %129 = vmatpush1.msra.mxu0 0.0
    %130 = vmatprep.subr.mxu0 0.0
    %131 = vmatpush1.msra.mxu0 0.0
    %132 = vmatprep.subr.mxu0 0.0
    %133 = vmatpush1.msra.mxu0 0.0
    %134 = vmatprep.subr.mxu0 0.0
    %135 = vmatpush1.msra.mxu0 0.0
    %136 = vmatprep.subr.mxu0 0.0
    %137 = vmatpush1.msra.mxu0 0.0
    %138 = vmatprep.subr.mxu0 0.0
    %139 = vmatpush1.msra.mxu0 0.0
    %140 = vmatprep.subr.mxu0 0.0
    %141 = vmatpush1.msra.mxu0 0.0
    %142 = vmatprep.subr.mxu0 0.0
    %143 = vmatpush1.msra.mxu0 0.0
    %144 = vmatprep.mubr.f32.mxu0 0.0
    %145 = vmatmul.mubr.f32.gmra.mrb[0].mxu0 %v69
    %v146 = vpop.f32.mrb[0].mxu0
    %v147 = vadd.f32 0.0, %v146
    %v148 = vpop.f32.mrb[0].mxu0
    %149 = vmatprep.mubr.f32.mxu0 0.0
    %150 = vmatmul.mubr.f32.gmra.mrb[0].mxu0 %v72
    %v151 = vpop.f32.mrb[0].mxu0
    %v152 = vadd.f32 0.0, %v151
    %v153 = vpop.f32.mrb[0].mxu0
    %154 = vmatprep.mubr.f32.mxu0 0.0
    %155 = vmatmul.mubr.f32.gmra.mrb[0].mxu0 %v75
    %v156 = vpop.f32.mrb[0].mxu0
    %v157 = vadd.f32 0.0, %v156
    %v158 = vpop.f32.mrb[0].mxu0
    %159 = vmatprep.mubr.f32.mxu0 0.0
    %160 = vmatmul.mubr.f32.gmra.mrb[0].mxu0 %v78
    %v161 = vpop.f32.mrb[0].mxu0
    %v162 = vadd.f32 0.0, %v161
    %v163 = vpop.f32.mrb[0].mxu0
    %164 = vdwg.mxu0
    %v165 = vld [vmem:[%s1] sm:$0xff]
    %v166 = vld [vmem:[%s1 + $0x8] sm:$0xff]
    %v167 = vld [vmem:[%s1 + $0x10] sm:$0xff]
    %v168 = vld [vmem:[%s1 + $0x18] sm:$0xff]
    %v169 = vadd.f32 %v165, %v147
    %v170 = vadd.f32 %v166, %v152
    %v171 = vadd.f32 %v167, %v157
    %v172 = vadd.f32 %v168, %v162
    %173 = vst [vmem:[#allocation5] sm:$0xff] %v169
    %174 = vst [vmem:[#allocation5 + $0x8] sm:$0xff] %v170
    %175 = vst [vmem:[#allocation5 + $0x10] sm:$0xff] %v171
    %176 = vst [vmem:[#allocation5 + $0x18] sm:$0xff] %v172
    // Predicated region
    $region18: #{_pe_gather_call.1} parent=1 // pred_check
      _
    $region19: #{_pe_gather_call.1} parent=1 // pred_check_branch
      %178 = sbr.rel (0) target = $region21
    $region20: #{_pe_gather_call.1} parent=1 // pred_region
      %s180 = ssub.s32 512, 512
      %181 = vsyncadd [#allocation4], %s180
      %s182 = sshll.u32 [#allocation5], 4
      %s183 = int_to_ptr.vmem [resolvable:$true] %s182
      %188 = dma.vmem_to_hbm [thread:$0]  %s183, 512, %s3, [#allocation4], 128, 128, 8
    $region21: #{_pe_gather_call.1} parent=1 // pred_fallthru
      _
    // Predicated region
    $region22: #{_pe_gather_call.1} parent=1 // pred_check
      _
    $region23: #{_pe_gather_call.1} parent=1 // pred_check_branch
      %190 = sbr.rel (0) target = $region25
    $region24: #{_pe_gather_call.1} parent=1 // pred_region
      %191 = dma.done [#allocation4], 512
    $region25: #{_pe_gather_call.1} parent=1 // pred_fallthru
      _
    %192 = vsyncpa [#allocation3], 1
    %193 = vsyncpa [#allocation4], 1

</llo_original>
